<compile_context>
chip_gen: v7x
topology: tpu7x:2x2x1
jax: 0.10.0
libtpu: 0.0.40
codegen_flags: <defaults>
</compile_context>

<pallas_src>
import jax
import jax.numpy as jnp
from jax.experimental import pallas as pl
from jax.experimental.pallas import tpu as pltpu

B, S, D = 2, 8, 32       # batch, seq_len, input_dim
H = 32                   # biaffine_dim
HL = 32                  # biaffine_label_dim (must equal H for packing)
L = 4                    # n_span_labels
NEG_SLOPE = 0.1          # LeakyReLU slope used by the MLP

BS = B * S               # batch folded into one block
C = 3 + L                # channels: span, ph, pt, label_0..label_{L-1}
HA = H + 1               # augmented biaffine dim ([x, 1])
WH = 7 * HA              # width of fused MLP output (7 blocks of [proj(32), 1])
OUT_W = 128              # lane-dense output width (C*BS = 112, padded to 128)

assert H == HL, "packing assumes biaffine_dim == biaffine_label_dim"
assert C * BS <= OUT_W


# --------------------------------- kernel ---------------------------------

def scorer_kernel(word_ref, wmlp_ref, wbia_ref, out_ref):
    x = word_ref[...]                                              # [BS, D]
    x1 = jnp.concatenate([x, jnp.ones((BS, 1), jnp.float32)], axis=1)   # [BS, D+1]

    # Fused MLPs: one matmul, biases folded via the ones column; each 33-lane
    # block is [projection(32), const 1].  (arc/label dropout: identity in eval)
    hcat = jnp.dot(x1, wmlp_ref[...], preferred_element_type=jnp.float32)  # [BS, WH]
    hcat = jnp.where(hcat >= 0, hcat, NEG_SLOPE * hcat)            # LeakyReLU(0.1); 1 -> 1

    # Augmented operands [proj, 1] are contiguous 33-lane slices of hcat.
    sl1 = hcat[:, 0 * HA:1 * HA]
    sr1 = hcat[:, 1 * HA:2 * HA]
    p1  = hcat[:, 2 * HA:3 * HA]
    h1  = hcat[:, 3 * HA:4 * HA]
    t1  = hcat[:, 4 * HA:5 * HA]
    pl1 = hcat[:, 5 * HA:6 * HA]
    hl1 = hcat[:, 6 * HA:7 * HA]

    wb = wbia_ref[...]                                             # [HA, 7*HA]

    # Stage 1: z = [x,1] @ W  (grouped by shared left operand; bias rows on MXU)
    z_span = jnp.dot(sl1, wb[:, 0:HA], preferred_element_type=jnp.float32)        # [BS, HA]
    z_pht  = jnp.dot(p1,  wb[:, HA:3 * HA], preferred_element_type=jnp.float32)   # [BS, 2*HA]
    z_lab  = jnp.dot(pl1, wb[:, 3 * HA:7 * HA], preferred_element_type=jnp.float32)  # [BS, L*HA]

    # Stage 2: s = z @ [y,1]^T  (contract last dims, i.e. A @ B.T)
    dn = (((1,), (1,)), ((), ()))
    span_raw = jax.lax.dot_general(z_span, sr1, dn,
                                   preferred_element_type=jnp.float32)            # [BS, BS]
    ph = jax.lax.dot_general(z_pht[:, 0:HA], h1, dn,
                             preferred_element_type=jnp.float32)                  # [BS, BS]
    pt = jax.lax.dot_general(z_pht[:, HA:2 * HA], t1, dn,
                             preferred_element_type=jnp.float32)                  # [BS, BS]

    # All L label channels share hl1 as the right operand -> one grouped matmul.
    z_lab_stack = jnp.concatenate(
        [z_lab[:, c * HA:(c + 1) * HA] for c in range(L)], axis=0)                # [L*BS, HA]
    lab_all = jax.lax.dot_general(z_lab_stack, hl1, dn,
                                  preferred_element_type=jnp.float32)             # [L*BS, BS]

    # span symmetrization: span.triu() + span.triu(1).transpose(-1,-2).
    # Done on the full [BS,BS] matrix; per-batch diagonal blocks transform exactly
    # as per-batch triu, and cross-batch blocks are discarded in the wrapper.
    row_i = jax.lax.broadcasted_iota(jnp.int32, (BS, BS), 0)
    col_i = jax.lax.broadcasted_iota(jnp.int32, (BS, BS), 1)
    upper  = jnp.where(col_i >= row_i, span_raw, 0.0)
    strict = jnp.where(col_i > row_i, span_raw, 0.0)
    span_sym = upper + strict.T

    # Lane-dense output: channels side-by-side along lanes, padded to 128.
    pieces = [span_sym, ph, pt] + [lab_all[c * BS:(c + 1) * BS, :] for c in range(L)]
    pieces.append(jnp.zeros((BS, OUT_W - C * BS), jnp.float32))
    out_ref[...] = jnp.concatenate(pieces, axis=1)                 # [BS, OUT_W]


# --------------------------------- wrapper ---------------------------------

def prepare_params(params):
    """Hoisted out of the per-call path: run once at init."""
    (wsl, bsl, wsr, bsr, wp, bp, wh, bh, wt, bt,
     wpl, bpl, whl, bhl, w_span, w_ph, w_pt, w_lab) = params

    def block(w, b):
        # [D, H] weight + [1, H] bias -> [D+1, H+1] block whose extra column
        # produces a constant 1 (zero weights, bias 1; LeakyReLU(1) = 1).
        top = jnp.concatenate([w, jnp.zeros((D, 1), jnp.float32)], axis=1)
        bot = jnp.concatenate([b, jnp.ones((1, 1), jnp.float32)], axis=1)
        return jnp.concatenate([top, bot], axis=0)

    # Block order must match kernel slices: sl, sr, p, h, t, p_label, h_label.
    wmlp_aug = jnp.concatenate(
        [block(wsl, bsl), block(wsr, bsr), block(wp, bp), block(wh, bh),
         block(wt, bt), block(wpl, bpl), block(whl, bhl)], axis=1)     # [D+1, WH]

    # Stage-1 biaffine weights grouped by shared left operand:
    # span (left sl), ph|pt (left p), label_0..3 (left p_label).
    wbia1 = jnp.concatenate([w_span, w_ph, w_pt] + [w_lab[c] for c in range(L)],
                            axis=1)                                    # [HA, 7*HA]
    return wmlp_aug, wbia1


def _extract(packed):
    """Slice the lane-dense [BS, OUT_W] buffer back into per-batch outputs."""
    def per_batch(m):  # m: [BS, BS] -> [B, S, S] diagonal blocks
        return jnp.stack([m[b * S:(b + 1) * S, b * S:(b + 1) * S] for b in range(B)],
                         axis=0)

    chans = [packed[:, c * BS:(c + 1) * BS] for c in range(C)]
    span = per_batch(chans[0])
    ph = per_batch(chans[1])
    pt = per_batch(chans[2])
    ph_label = jnp.stack([per_batch(chans[3 + l]) for l in range(L)], axis=-1)  # [B,S,S,L]
    return span, ph, pt, ph_label


@jax.jit
def srl_first_order_scorer(word, wmlp_aug, wbia1):
    word2d = word.reshape(BS, D)

    packed = pl.pallas_call(
        scorer_kernel,
        out_shape=jax.ShapeDtypeStruct((BS, OUT_W), jnp.float32),
        in_specs=[pl.BlockSpec(memory_space=pltpu.MemorySpace.VMEM)] * 3,
        out_specs=pl.BlockSpec(memory_space=pltpu.MemorySpace.VMEM),
    )(word2d, wmlp_aug, wbia1)

    return _extract(packed)

# TODO(synk): config-disabled branches (split 'a'/'l', ensemble_label, ph_arc) and
# training-mode dropout are intentionally not implemented in this kernel.


# --------------------------- deterministic params ---------------------------

def init_params(key):
    ks = jax.random.split(key, 12)

    def linear(k, din, dout):
        kw, kb = jax.random.split(k)
        w = jax.random.normal(kw, (din, dout), jnp.float32) / jnp.sqrt(float(din))
        b = 0.01 * jax.random.normal(kb, (1, dout), jnp.float32)
        return w, b

    wsl, bsl = linear(ks[0], D, H)
    wsr, bsr = linear(ks[1], D, H)
    wp, bp = linear(ks[2], D, H)
    wh, bh = linear(ks[3], D, H)
    wt, bt = linear(ks[4], D, H)
    wpl, bpl = linear(ks[5], D, HL)
    whl, bhl = linear(ks[6], D, HL)
    w_span = 0.1 * jax.random.normal(ks[7], (H + 1, H + 1), jnp.float32)
    w_ph = 0.1 * jax.random.normal(ks[8], (H + 1, H + 1), jnp.float32)
    w_pt = 0.1 * jax.random.normal(ks[9], (H + 1, H + 1), jnp.float32)
    w_lab = 0.1 * jax.random.normal(ks[10], (L, HL + 1, HL + 1), jnp.float32)
    return (wsl, bsl, wsr, bsr, wp, bp, wh, bh, wt, bt,
            wpl, bpl, whl, bhl, w_span, w_ph, w_pt, w_lab)


# ------------------------------ JAX reference -------------------------------

def reference(word, params):
    (wsl, bsl, wsr, bsr, wp, bp, wh, bh, wt, bt,
     wpl, bpl, whl, bhl, w_span, w_ph, w_pt, w_lab) = params

    def mlp(x, w, b):
        y = x @ w + b[0]
        return jnp.where(y >= 0, y, NEG_SLOPE * y)

    def biaff(x, y, w):  # w: [n_out, Hx+1, Hx+1]
        ones = jnp.ones(x.shape[:-1] + (1,), x.dtype)
        xa = jnp.concatenate([x, ones], -1)
        ya = jnp.concatenate([y, ones], -1)
        return jnp.einsum('bxi,oij,byj->boxy', xa, w, ya)

    sl, sr = mlp(word, wsl, bsl), mlp(word, wsr, bsr)
    p, h, t = mlp(word, wp, bp), mlp(word, wh, bh), mlp(word, wt, bt)
    pl_, hl_ = mlp(word, wpl, bpl), mlp(word, whl, bhl)

    span = biaff(sl, sr, w_span[None])[:, 0]
    span = jnp.triu(span) + jnp.swapaxes(jnp.triu(span, 1), -1, -2)
    ph = biaff(p, h, w_ph[None])[:, 0]
    pt = biaff(p, t, w_pt[None])[:, 0]
    ph_label = jnp.transpose(biaff(pl_, hl_, w_lab), (0, 2, 3, 1))
    return span, ph, pt, ph_label


# ----------------------------------- main -----------------------------------

if __name__ == "__main__":
    key = jax.random.PRNGKey(0)
    k_word, k_par = jax.random.split(key)
    word = jax.random.normal(k_word, (B, S, D), jnp.float32)
    params = init_params(k_par)

    wmlp_aug, wbia1 = prepare_params(params)   # hoisted: done once, not per call

    outs = jax.block_until_ready(srl_first_order_scorer(word, wmlp_aug, wbia1))
    refs = jax.block_until_ready(reference(word, params))

    for o, r in zip(outs, refs):
        assert o.shape == r.shape, (o.shape, r.shape)
        assert jnp.allclose(o, r, atol=1e-3, rtol=1e-3), "mismatch vs reference"

    print("KERNEL_OK")
</pallas_src>

<mosaic_0001>
module attributes {stable_mosaic.version = 11 : i64} {
  func.func @scorer_kernel(%arg0: memref<16x32xf32, #tpu.memory_space<vmem>>, %arg1: memref<33x231xf32, #tpu.memory_space<vmem>>, %arg2: memref<33x231xf32, #tpu.memory_space<vmem>>, %arg3: memref<16x128xf32, #tpu.memory_space<vmem>>) attributes {dimension_semantics = [], scalar_prefetch = 0 : i64, scratch_operands = 0 : i64, tpu.core_type = #tpu.core_type<tc>} {
    %c0 = arith.constant 0 : index
    %c0_0 = arith.constant 0 : index
    %0 = vector.load %arg0[%c0, %c0_0] : memref<16x32xf32, #tpu.memory_space<vmem>>, vector<16x32xf32>
    %cst = arith.constant 1.000000e+00 : f32
    %1 = vector.broadcast %cst : f32 to vector<16x1xf32>
    %2 = tpu.concatenate %0, %1 in 1 : vector<16x32xf32>, vector<16x1xf32> -> vector<16x33xf32>
    %c0_1 = arith.constant 0 : index
    %c0_2 = arith.constant 0 : index
    %3 = vector.load %arg1[%c0_1, %c0_2] : memref<33x231xf32, #tpu.memory_space<vmem>>, vector<33x231xf32>
    %cst_3 = arith.constant dense<0.000000e+00> : vector<16x231xf32>
    %4 = tpu.matmul %2, %3, %cst_3 {dimension_numbers = #tpu.dot_dimension_numbers<[1], [0], [0], [1], [0, 0, 1, 1], [], []>} : vector<16x33xf32>, vector<33x231xf32>, vector<16x231xf32> -> vector<16x231xf32>
    %cst_4 = arith.constant 0.000000e+00 : f32
    %5 = vector.broadcast %cst_4 : f32 to vector<16x231xf32>
    %6 = arith.cmpf oge, %4, %5 : vector<16x231xf32>
    %cst_5 = arith.constant 1.000000e-01 : f32
    %7 = vector.broadcast %cst_5 : f32 to vector<16x231xf32>
    %8 = arith.mulf %7, %4 : vector<16x231xf32>
    %9 = arith.select %6, %4, %8 : vector<16x231xi1>, vector<16x231xf32>
    %10 = vector.extract_strided_slice %9 {offsets = [0, 0], sizes = [16, 33], strides = [1, 1]} : vector<16x231xf32> to vector<16x33xf32>
    %11 = vector.extract_strided_slice %9 {offsets = [0, 33], sizes = [16, 33], strides = [1, 1]} : vector<16x231xf32> to vector<16x33xf32>
    %12 = vector.extract_strided_slice %9 {offsets = [0, 66], sizes = [16, 33], strides = [1, 1]} : vector<16x231xf32> to vector<16x33xf32>
    %13 = vector.extract_strided_slice %9 {offsets = [0, 99], sizes = [16, 33], strides = [1, 1]} : vector<16x231xf32> to vector<16x33xf32>
    %14 = vector.extract_strided_slice %9 {offsets = [0, 132], sizes = [16, 33], strides = [1, 1]} : vector<16x231xf32> to vector<16x33xf32>
    %15 = vector.extract_strided_slice %9 {offsets = [0, 165], sizes = [16, 33], strides = [1, 1]} : vector<16x231xf32> to vector<16x33xf32>
    %16 = vector.extract_strided_slice %9 {offsets = [0, 198], sizes = [16, 33], strides = [1, 1]} : vector<16x231xf32> to vector<16x33xf32>
    %c0_6 = arith.constant 0 : index
    %c0_7 = arith.constant 0 : index
    %17 = vector.load %arg2[%c0_6, %c0_7] : memref<33x231xf32, #tpu.memory_space<vmem>>, vector<33x231xf32>
    %18 = vector.extract_strided_slice %17 {offsets = [0, 0], sizes = [33, 33], strides = [1, 1]} : vector<33x231xf32> to vector<33x33xf32>
    %cst_8 = arith.constant dense<0.000000e+00> : vector<16x33xf32>
    %19 = tpu.matmul %10, %18, %cst_8 {dimension_numbers = #tpu.dot_dimension_numbers<[1], [0], [0], [1], [0, 0, 1, 1], [], []>} : vector<16x33xf32>, vector<33x33xf32>, vector<16x33xf32> -> vector<16x33xf32>
    %20 = vector.extract_strided_slice %17 {offsets = [0, 33], sizes = [33, 66], strides = [1, 1]} : vector<33x231xf32> to vector<33x66xf32>
    %cst_9 = arith.constant dense<0.000000e+00> : vector<16x66xf32>
    %21 = tpu.matmul %12, %20, %cst_9 {dimension_numbers = #tpu.dot_dimension_numbers<[1], [0], [0], [1], [0, 0, 1, 1], [], []>} : vector<16x33xf32>, vector<33x66xf32>, vector<16x66xf32> -> vector<16x66xf32>
    %22 = vector.extract_strided_slice %17 {offsets = [0, 99], sizes = [33, 132], strides = [1, 1]} : vector<33x231xf32> to vector<33x132xf32>
    %cst_10 = arith.constant dense<0.000000e+00> : vector<16x132xf32>
    %23 = tpu.matmul %15, %22, %cst_10 {dimension_numbers = #tpu.dot_dimension_numbers<[1], [0], [0], [1], [0, 0, 1, 1], [], []>} : vector<16x33xf32>, vector<33x132xf32>, vector<16x132xf32> -> vector<16x132xf32>
    %cst_11 = arith.constant dense<0.000000e+00> : vector<16x16xf32>
    %24 = tpu.matmul %19, %11, %cst_11 {dimension_numbers = #tpu.dot_dimension_numbers<[1], [1], [0], [0], [0, 0, 1, 0], [], []>} : vector<16x33xf32>, vector<16x33xf32>, vector<16x16xf32> -> vector<16x16xf32>
    %25 = vector.extract_strided_slice %21 {offsets = [0, 0], sizes = [16, 33], strides = [1, 1]} : vector<16x66xf32> to vector<16x33xf32>
    %cst_12 = arith.constant dense<0.000000e+00> : vector<16x16xf32>
    %26 = tpu.matmul %25, %13, %cst_12 {dimension_numbers = #tpu.dot_dimension_numbers<[1], [1], [0], [0], [0, 0, 1, 0], [], []>} : vector<16x33xf32>, vector<16x33xf32>, vector<16x16xf32> -> vector<16x16xf32>
    %27 = vector.extract_strided_slice %21 {offsets = [0, 33], sizes = [16, 33], strides = [1, 1]} : vector<16x66xf32> to vector<16x33xf32>
    %cst_13 = arith.constant dense<0.000000e+00> : vector<16x16xf32>
    %28 = tpu.matmul %27, %14, %cst_13 {dimension_numbers = #tpu.dot_dimension_numbers<[1], [1], [0], [0], [0, 0, 1, 0], [], []>} : vector<16x33xf32>, vector<16x33xf32>, vector<16x16xf32> -> vector<16x16xf32>
    %29 = vector.extract_strided_slice %23 {offsets = [0, 0], sizes = [16, 33], strides = [1, 1]} : vector<16x132xf32> to vector<16x33xf32>
    %30 = vector.extract_strided_slice %23 {offsets = [0, 33], sizes = [16, 33], strides = [1, 1]} : vector<16x132xf32> to vector<16x33xf32>
    %31 = vector.extract_strided_slice %23 {offsets = [0, 66], sizes = [16, 33], strides = [1, 1]} : vector<16x132xf32> to vector<16x33xf32>
    %32 = vector.extract_strided_slice %23 {offsets = [0, 99], sizes = [16, 33], strides = [1, 1]} : vector<16x132xf32> to vector<16x33xf32>
    %33 = tpu.concatenate %29, %30, %31, %32 in 0 : vector<16x33xf32>, vector<16x33xf32>, vector<16x33xf32>, vector<16x33xf32> -> vector<64x33xf32>
    %cst_14 = arith.constant dense<0.000000e+00> : vector<64x16xf32>
    %34 = tpu.matmul %33, %16, %cst_14 {dimension_numbers = #tpu.dot_dimension_numbers<[1], [1], [0], [0], [0, 0, 1, 0], [], []>} : vector<64x33xf32>, vector<16x33xf32>, vector<64x16xf32> -> vector<64x16xf32>
    %35 = tpu.iota {dimensions = array<i32: 0>} : vector<16x16xi32>
    %36 = tpu.iota {dimensions = array<i32: 1>} : vector<16x16xi32>
    %37 = arith.cmpi sge, %36, %35 : vector<16x16xi32>
    %cst_15 = arith.constant 0.000000e+00 : f32
    %38 = vector.broadcast %cst_15 : f32 to vector<16x16xf32>
    %39 = arith.select %37, %24, %38 : vector<16x16xi1>, vector<16x16xf32>
    %40 = arith.cmpi sgt, %36, %35 : vector<16x16xi32>
    %cst_16 = arith.constant 0.000000e+00 : f32
    %41 = vector.broadcast %cst_16 : f32 to vector<16x16xf32>
    %42 = arith.select %40, %24, %41 : vector<16x16xi1>, vector<16x16xf32>
    %43 = tpu.transpose %42, [1, 0] : vector<16x16xf32> -> vector<16x16xf32>
    %44 = arith.addf %39, %43 : vector<16x16xf32>
    %45 = vector.extract_strided_slice %34 {offsets = [0, 0], sizes = [16, 16], strides = [1, 1]} : vector<64x16xf32> to vector<16x16xf32>
    %46 = vector.extract_strided_slice %34 {offsets = [16, 0], sizes = [16, 16], strides = [1, 1]} : vector<64x16xf32> to vector<16x16xf32>
    %47 = vector.extract_strided_slice %34 {offsets = [32, 0], sizes = [16, 16], strides = [1, 1]} : vector<64x16xf32> to vector<16x16xf32>
    %48 = vector.extract_strided_slice %34 {offsets = [48, 0], sizes = [16, 16], strides = [1, 1]} : vector<64x16xf32> to vector<16x16xf32>
    %cst_17 = arith.constant 0.000000e+00 : f32
    %49 = vector.broadcast %cst_17 : f32 to vector<16x16xf32>
    %50 = tpu.concatenate %44, %26, %28, %45, %46, %47, %48, %49 in 1 : vector<16x16xf32>, vector<16x16xf32>, vector<16x16xf32>, vector<16x16xf32>, vector<16x16xf32>, vector<16x16xf32>, vector<16x16xf32>, vector<16x16xf32> -> vector<16x128xf32>
    %c0_18 = arith.constant 0 : index
    %c0_19 = arith.constant 0 : index
    %51 = vector.load %arg3[%c0_18, %c0_19] : memref<16x128xf32, #tpu.memory_space<vmem>>, vector<16x128xf32>
    tpu.vector_store %arg3[%c0_18, %c0_19], %50 {strides = array<i32>} : memref<16x128xf32, #tpu.memory_space<vmem>>, vector<16x128xf32>,
    return
  }
}

</mosaic_0001>

<llo_original>
// kernel: srl_first_order_scorer.1
$region0: #{srl_first_order_scorer.1}
  #allocation0 [shape = 'u32[]', space=smem, size = 0x4, offset = 0x4, fixed_abs, tag = 'smem constant byte address 0x4 - core index']
  #allocation1 [shape = 'u32[144,128]{1,0:T(1,128)}', space=vmem, size = 0x12000, scoped, tag = 'internal scratch']
  %s0 = inlined_call_operand.hbm [shape: f32[16,32], index: 0, kind: input, shape index: {}]
  %s1 = inlined_call_operand.hbm [shape: f32[33,231], index: 1, kind: input, shape index: {}]
  %s2 = inlined_call_operand.hbm [shape: f32[33,231], index: 2, kind: input, shape index: {}]
  %s3 = inlined_call_operand.vmem [shape: f32[16,128], index: 3, kind: output, shape index: {}]
  %s4 = sld [smem:[#allocation0]]
  $region34: #{srl_first_order_scorer.1} parent=0
    _
  %s6 = ssub.s32 1, %s4
  %s7 = scalar_select 0, %s6, %s4
  $region1: #{srl_first_order_scorer.1} parent=0
    #allocation2 [shape = 'u8[8192]{0}', space=vmem, size = 0x2000, scoped, tag = 'input window, operand 0, single buffered']
    #allocation3 [shape = 's32[1]{0}', space=sflag, size = 0x4, scoped, tag = 'scoped memory for srl_first_order_scorer.1']
    #allocation4 [shape = 'u8[40960]{0}', space=vmem, size = 0xa000, scoped, tag = 'input window, operand 1, single buffered']
    #allocation5 [shape = 's32[1]{0}', space=sflag, size = 0x4, scoped, tag = 'scoped memory for srl_first_order_scorer.1']
    #allocation6 [shape = 'u8[40960]{0}', space=vmem, size = 0xa000, scoped, tag = 'input window, operand 2, single buffered']
    %8 = vsyncpa [#allocation3], 0
    %9 = vsyncpa [#allocation5], 0
    // Predicated region
    $region2: #{srl_first_order_scorer.1} parent=1 // pred_check
      _
    $region3: #{srl_first_order_scorer.1} parent=1 // pred_check_branch
      %11 = sbr.rel (0) target = $region5
    $region4: #{srl_first_order_scorer.1} parent=1 // pred_region
      %s13 = ssub.s32 256, 256
      %14 = vsyncadd [#allocation3], %s13
      %s15 = sshll.u32 [#allocation2], 4
      %s16 = int_to_ptr.vmem [resolvable:$true] %s15
      %21 = dma.hbm_to_vmem [thread:$0]  %s0, 256, %s16, [#allocation3], 128, 128, 8
    $region5: #{srl_first_order_scorer.1} parent=1 // pred_fallthru
      _
    // Predicated region
    $region6: #{srl_first_order_scorer.1} parent=1 // pred_check
      _
    $region7: #{srl_first_order_scorer.1} parent=1 // pred_check_branch
      %23 = sbr.rel (0) target = $region9
    $region8: #{srl_first_order_scorer.1} parent=1 // pred_region
      %s25 = ssub.s32 1280, 1280
      %26 = vsyncadd [#allocation5], %s25
      %s27 = sshll.u32 [#allocation4], 4
      %s28 = int_to_ptr.vmem [resolvable:$true] %s27
      %33 = dma.hbm_to_vmem [thread:$0]  %s1, 1280, %s28, [#allocation5], 256, 256, 16
    $region9: #{srl_first_order_scorer.1} parent=1 // pred_fallthru
      _
    // Predicated region
    $region10: #{srl_first_order_scorer.1} parent=1 // pred_check
      _
    $region11: #{srl_first_order_scorer.1} parent=1 // pred_check_branch
      %35 = sbr.rel (0) target = $region13
    $region12: #{srl_first_order_scorer.1} parent=1 // pred_region
      %s37 = ssub.s32 1280, 1280
      %38 = vsyncadd [#allocation5], %s37
      %s39 = sshll.u32 [#allocation6], 4
      %s40 = int_to_ptr.vmem [resolvable:$true] %s39
      %45 = dma.hbm_to_vmem [thread:$0]  %s2, 1280, %s40, [#allocation5], 256, 256, 16
    $region13: #{srl_first_order_scorer.1} parent=1 // pred_fallthru
      _
    // Predicated region
    $region14: #{srl_first_order_scorer.1} parent=1 // pred_check
      _
    $region15: #{srl_first_order_scorer.1} parent=1 // pred_check_branch
      %47 = sbr.rel (0) target = $region17
    $region16: #{srl_first_order_scorer.1} parent=1 // pred_region
      %48 = dma.done [#allocation3], 256
    $region17: #{srl_first_order_scorer.1} parent=1 // pred_fallthru
      _
    // Predicated region
    $region18: #{srl_first_order_scorer.1} parent=1 // pred_check
      _
    $region19: #{srl_first_order_scorer.1} parent=1 // pred_check_branch
      %50 = sbr.rel (0) target = $region21
    $region20: #{srl_first_order_scorer.1} parent=1 // pred_region
      %51 = dma.done [#allocation5], 1280
    $region21: #{srl_first_order_scorer.1} parent=1 // pred_fallthru
      _
    // Predicated region
    $region22: #{srl_first_order_scorer.1} parent=1 // pred_check
      _
    $region23: #{srl_first_order_scorer.1} parent=1 // pred_check_branch
      %53 = sbr.rel (0) target = $region25
    $region24: #{srl_first_order_scorer.1} parent=1 // pred_region
      %54 = dma.done [#allocation5], 1280
    $region25: #{srl_first_order_scorer.1} parent=1 // pred_fallthru
      _
    %v55 = vld [vmem:[#allocation2] sm:$0xff]
    %v56 = vld [vmem:[#allocation2 + $0x8] sm:$0xff]
    %vm57 = vcmask 261120
    %v58 = vsel %vm57, %v55, 1.0
    %v59 = vsel %vm57, %v56, 1.0
    %v60 = vld [vmem:[#allocation4] sm:$0xff]
    %v61 = vld [vmem:[#allocation4 + $0x8] sm:$0xff]
    %v62 = vld [vmem:[#allocation4 + $0x10] sm:$0xff]
    %v63 = vld [vmem:[#allocation4 + $0x18] sm:$0xff]
    %v64 = vld [vmem:[#allocation4 + $0x20] sm:$0xff]
    %v65 = vld [vmem:[#allocation4 + $0x28] sm:$0xff]
    %v66 = vld [vmem:[#allocation4 + $0x30] sm:$0xff]
    %v67 = vld [vmem:[#allocation4 + $0x38] sm:$0xff]
    %v68 = vld [vmem:[#allocation4 + $0x40] sm:$0x1]
    %v69 = vld [vmem:[#allocation4 + $0x48] sm:$0x1]
    %vm70 = vcmask 269312
    %v72 = vsel %vm70, %v58, 0
    %v75 = vsel %vm70, %v59, 0
    %vm77 = vcmask 1040384
    %v79 = vsel %vm77, %v68, 0
    %v82 = vsel %vm77, %v69, 0
    %84 = vmatprep.subr.mxu0 %v61
    %85 = vmatpush1.msra.mxu0 %v60
    %86 = vmatprep.subr.mxu0 %v63
    %87 = vmatpush1.msra.mxu0 %v62
    %88 = vmatprep.subr.mxu0 %v65
    %89 = vmatpush1.msra.mxu0 %v64
    %90 = vmatprep.subr.mxu0 %v67
    %91 = vmatpush1.msra.mxu0 %v66
    %92 = vmatprep.subr.mxu0 %v82
    %93 = vmatpush1.msra.mxu0 %v79
    %94 = vmatprep.subr.mxu0 0.0
    %95 = vmatpush1.msra.mxu0 0.0
    %96 = vmatprep.subr.mxu0 0.0
    %97 = vmatpush1.msra.mxu0 0.0
    %98 = vmatprep.subr.mxu0 0.0
    %99 = vmatpush1.msra.mxu0 0.0
    %100 = vmatprep.subr.mxu0 0.0
    %101 = vmatpush1.msra.mxu0 0.0
    %102 = vmatprep.subr.mxu0 0.0
    %103 = vmatpush1.msra.mxu0 0.0
    %104 = vmatprep.subr.mxu0 0.0
    %105 = vmatpush1.msra.mxu0 0.0
    %106 = vmatprep.subr.mxu0 0.0
    %107 = vmatpush1.msra.mxu0 0.0
    %108 = vmatprep.subr.mxu0 0.0
    %109 = vmatpush1.msra.mxu0 0.0
    %110 = vmatprep.subr.mxu0 0.0
    %111 = vmatpush1.msra.mxu0 0.0
    %112 = vmatprep.subr.mxu0 0.0
    %113 = vmatpush1.msra.mxu0 0.0
    %114 = vmatprep.subr.mxu0 0.0
    %115 = vmatpush1.msra.mxu0 0.0
    %116 = vmatprep.subr.mxu0 0.0
    %117 = vmatpush1.msra.mxu0 0.0
    %118 = vmatprep.subr.mxu0 0.0
    %119 = vmatpush1.msra.mxu0 0.0
    %120 = vmatprep.subr.mxu0 0.0
    %121 = vmatpush1.msra.mxu0 0.0
    %122 = vmatprep.subr.mxu0 0.0
    %123 = vmatpush1.msra.mxu0 0.0
    %124 = vmatprep.subr.mxu0 0.0
    %125 = vmatpush1.msra.mxu0 0.0
    %126 = vmatprep.subr.mxu0 0.0
    %127 = vmatpush1.msra.mxu0 0.0
    %128 = vmatprep.subr.mxu0 0.0
    %129 = vmatpush1.msra.mxu0 0.0
    %130 = vmatprep.subr.mxu0 0.0
    %131 = vmatpush1.msra.mxu0 0.0
    %132 = vmatprep.subr.mxu0 0.0
    %133 = vmatpush1.msra.mxu0 0.0
    %134 = vmatprep.subr.mxu0 0.0
    %135 = vmatpush1.msra.mxu0 0.0
    %136 = vmatprep.subr.mxu0 0.0
    %137 = vmatpush1.msra.mxu0 0.0
    %138 = vmatprep.subr.mxu0 0.0
    %139 = vmatpush1.msra.mxu0 0.0
    %140 = vmatprep.subr.mxu0 0.0
    %141 = vmatpush1.msra.mxu0 0.0
    %142 = vmatprep.subr.mxu0 0.0
    %143 = vmatpush1.msra.mxu0 0.0
    %144 = vmatprep.subr.mxu0 0.0
    %145 = vmatpush1.msra.mxu0 0.0
    %146 = vmatprep.subr.mxu0 0.0
    %147 = vmatpush1.msra.mxu0 0.0
    %148 = vmatprep.mubr.f32.mxu0 0.0
    %149 = vmatmul.mubr.f32.gmra.mrb[0].mxu0 %v72
    %v150 = vpop.f32.mrb[0].mxu0
    %v151 = vadd.f32 0.0, %v150
    %v152 = vpop.f32.mrb[0].mxu0
    %v153 = vadd.f32 0.0, %v152
    %154 = vmatprep.mubr.f32.mxu0 0.0
    %155 = vmatmul.mubr.f32.gmra.mrb[0].mxu0 %v75
    %v156 = vpop.f32.mrb[0].mxu0
    %v157 = vadd.f32 0.0, %v156
    %v158 = vpop.f32.mrb[0].mxu0
    %v159 = vadd.f32 0.0, %v158
    %160 = vdwg.mxu0
    %vm161 = vcmp.ge.f32.partialorder %v151, 0.0
    %vm162 = vcmp.ge.f32.partialorder %v153, 0.0
    %vm163 = vcmp.ge.f32.partialorder %v157, 0.0
    %vm164 = vcmp.ge.f32.partialorder %v159, 0.0
    %v165 = vmul.f32 %v151, 0.1
    %v166 = vmul.f32 %v153, 0.1
    %v167 = vmul.f32 %v157, 0.1
    %v168 = vmul.f32 %v159, 0.1
    %v169 = vsel %vm161, %v151, %v165
    %v170 = vsel %vm162, %v153, %v166
    %v171 = vsel %vm163, %v157, %v167
    %v172 = vsel %vm164, %v159, %v168
    %v173 = vld [vmem:[#allocation6] sm:$0xff]
    %v174 = vld [vmem:[#allocation6 + $0x8] sm:$0xff]
    %v175 = vld [vmem:[#allocation6 + $0x10] sm:$0xff]
    %v176 = vld [vmem:[#allocation6 + $0x18] sm:$0xff]
    %v177 = vld [vmem:[#allocation6 + $0x20] sm:$0xff]
    %v178 = vld [vmem:[#allocation6 + $0x28] sm:$0xff]
    %v179 = vld [vmem:[#allocation6 + $0x30] sm:$0xff]
    %v180 = vld [vmem:[#allocation6 + $0x38] sm:$0xff]
    %v181 = vld [vmem:[#allocation6 + $0x40] sm:$0x1]
    %v182 = vld [vmem:[#allocation6 + $0x48] sm:$0x1]
    %v184 = vsel %vm70, %v169, 0
    %v187 = vsel %vm70, %v171, 0
    %v190 = vsel %vm77, %v181, 0
    %192 = vmatprep.subr.mxu0 0.0
    %193 = vmatpush1.msra.mxu0 %v173
    %194 = vmatprep.subr.mxu0 0.0
    %195 = vmatpush1.msra.mxu0 %v175
    %196 = vmatprep.subr.mxu0 0.0
    %197 = vmatpush1.msra.mxu0 %v177
    %198 = vmatprep.subr.mxu0 0.0
    %199 = vmatpush1.msra.mxu0 %v179
    %200 = vmatprep.subr.mxu0 0.0
    %201 = vmatpush1.msra.mxu0 %v190
    %202 = vmatprep.subr.mxu0 0.0
    %203 = vmatpush1.msra.mxu0 0.0
    %204 = vmatprep.subr.mxu0 0.0
    %205 = vmatpush1.msra.mxu0 0.0
    %206 = vmatprep.subr.mxu0 0.0
    %207 = vmatpush1.msra.mxu0 0.0
    %208 = vmatprep.subr.mxu0 0.0
    %209 = vmatpush1.msra.mxu0 0.0
    %210 = vmatprep.subr.mxu0 0.0
    %211 = vmatpush1.msra.mxu0 0.0
    %212 = vmatprep.subr.mxu0 0.0
    %213 = vmatpush1.msra.mxu0 0.0
    %214 = vmatprep.subr.mxu0 0.0
    %215 = vmatpush1.msra.mxu0 0.0
    %216 = vmatprep.subr.mxu0 0.0
    %217 = vmatpush1.msra.mxu0 0.0
    %218 = vmatprep.subr.mxu0 0.0
    %219 = vmatpush1.msra.mxu0 0.0
    %220 = vmatprep.subr.mxu0 0.0
    %221 = vmatpush1.msra.mxu0 0.0
    %222 = vmatprep.subr.mxu0 0.0
    %223 = vmatpush1.msra.mxu0 0.0
    %224 = vmatprep.subr.mxu0 0.0
    %225 = vmatpush1.msra.mxu0 0.0
    %226 = vmatprep.subr.mxu0 0.0
    %227 = vmatpush1.msra.mxu0 0.0
    %228 = vmatprep.subr.mxu0 0.0
    %229 = vmatpush1.msra.mxu0 0.0
    %230 = vmatprep.subr.mxu0 0.0
    %231 = vmatpush1.msra.mxu0 0.0
    %232 = vmatprep.subr.mxu0 0.0
    %233 = vmatpush1.msra.mxu0 0.0
    %234 = vmatprep.subr.mxu0 0.0
    %235 = vmatpush1.msra.mxu0 0.0
    %236 = vmatprep.subr.mxu0 0.0
    %237 = vmatpush1.msra.mxu0 0.0
    %238 = vmatprep.subr.mxu0 0.0
    %239 = vmatpush1.msra.mxu0 0.0
    %240 = vmatprep.subr.mxu0 0.0
    %241 = vmatpush1.msra.mxu0 0.0
    %242 = vmatprep.subr.mxu0 0.0
    %243 = vmatpush1.msra.mxu0 0.0
    %244 = vmatprep.subr.mxu0 0.0
    %245 = vmatpush1.msra.mxu0 0.0
    %246 = vmatprep.subr.mxu0 0.0
    %247 = vmatpush1.msra.mxu0 0.0
    %248 = vmatprep.subr.mxu0 0.0
    %249 = vmatpush1.msra.mxu0 0.0
    %250 = vmatprep.subr.mxu0 0.0
    %251 = vmatpush1.msra.mxu0 0.0
    %252 = vmatprep.subr.mxu0 0.0
    %253 = vmatpush1.msra.mxu0 0.0
    %254 = vmatprep.subr.mxu0 0.0
    %255 = vmatpush1.msra.mxu0 0.0
    %256 = vmatprep.mubr.f32.mxu0 0.0
    %257 = vmatmul.mubr.f32.gmra.mrb[0].mxu0 %v184
    %v258 = vpop.f32.mrb[0].mxu0
    %v259 = vadd.f32 0.0, %v258
    %v260 = vpop.f32.mrb[0].mxu0
    %261 = vmatprep.mubr.f32.mxu0 0.0
    %262 = vmatmul.mubr.f32.gmra.mrb[0].mxu0 %v187
    %v263 = vpop.f32.mrb[0].mxu0
    %v264 = vadd.f32 0.0, %v263
    %v265 = vpop.f32.mrb[0].mxu0
    %266 = vdwg.mxu0
    %267 = vrot.lane.b32.xlu0 %v169, 62
    %v268 = vpop.permute.xlu0 %267
    %269 = vrot.lane.b32.xlu0 %v171, 62
    %v270 = vpop.permute.xlu0 %269
    %275 = vrot.lane.b32.xlu0 %v173, 95
    %v276 = vpop.permute.xlu0 %275
    %277 = vrot.lane.b32.xlu0 %v175, 95
    %v278 = vpop.permute.xlu0 %277
    %279 = vrot.lane.b32.xlu0 %v177, 95
    %v280 = vpop.permute.xlu0 %279
    %281 = vrot.lane.b32.xlu0 %v179, 95
    %v282 = vpop.permute.xlu0 %281
    %283 = vrot.lane.b32.xlu0 %v181, 95
    %v284 = vpop.permute.xlu0 %283
    %v289 = vsel %vm70, %v268, 0
    %v291 = vsel %vm70, %v270, 0
    %v293 = vsel %vm77, %v284, 0
    %295 = vmatprep.subr.mxu0 0.0
    %296 = vmatpush1.msra.mxu0 %v276
    %297 = vmatprep.subr.mxu0 0.0
    %298 = vmatpush1.msra.mxu0 %v278
    %299 = vmatprep.subr.mxu0 0.0
    %300 = vmatpush1.msra.mxu0 %v280
    %301 = vmatprep.subr.mxu0 0.0
    %302 = vmatpush1.msra.mxu0 %v282
    %303 = vmatprep.subr.mxu0 0.0
    %304 = vmatpush1.msra.mxu0 %v293
    %305 = vmatprep.subr.mxu0 0.0
    %306 = vmatpush1.msra.mxu0 0.0
    %307 = vmatprep.subr.mxu0 0.0
    %308 = vmatpush1.msra.mxu0 0.0
    %309 = vmatprep.subr.mxu0 0.0
    %310 = vmatpush1.msra.mxu0 0.0
    %311 = vmatprep.subr.mxu0 0.0
    %312 = vmatpush1.msra.mxu0 0.0
    %313 = vmatprep.subr.mxu0 0.0
    %314 = vmatpush1.msra.mxu0 0.0
    %315 = vmatprep.subr.mxu0 0.0
    %316 = vmatpush1.msra.mxu0 0.0
    %317 = vmatprep.subr.mxu0 0.0
    %318 = vmatpush1.msra.mxu0 0.0
    %319 = vmatprep.subr.mxu0 0.0
    %320 = vmatpush1.msra.mxu0 0.0
    %321 = vmatprep.subr.mxu0 0.0
    %322 = vmatpush1.msra.mxu0 0.0
    %323 = vmatprep.subr.mxu0 0.0
    %324 = vmatpush1.msra.mxu0 0.0
    %325 = vmatprep.subr.mxu0 0.0
    %326 = vmatpush1.msra.mxu0 0.0
    %327 = vmatprep.subr.mxu0 0.0
    %328 = vmatpush1.msra.mxu0 0.0
    %329 = vmatprep.subr.mxu0 0.0
    %330 = vmatpush1.msra.mxu0 0.0
    %331 = vmatprep.subr.mxu0 0.0
    %332 = vmatpush1.msra.mxu0 0.0
    %333 = vmatprep.subr.mxu0 0.0
    %334 = vmatpush1.msra.mxu0 0.0
    %335 = vmatprep.subr.mxu0 0.0
    %336 = vmatpush1.msra.mxu0 0.0
    %337 = vmatprep.subr.mxu0 0.0
    %338 = vmatpush1.msra.mxu0 0.0
    %339 = vmatprep.subr.mxu0 0.0
    %340 = vmatpush1.msra.mxu0 0.0
    %341 = vmatprep.subr.mxu0 0.0
    %342 = vmatpush1.msra.mxu0 0.0
    %343 = vmatprep.subr.mxu0 0.0
    %344 = vmatpush1.msra.mxu0 0.0
    %345 = vmatprep.subr.mxu0 0.0
    %346 = vmatpush1.msra.mxu0 0.0
    %347 = vmatprep.subr.mxu0 0.0
    %348 = vmatpush1.msra.mxu0 0.0
    %349 = vmatprep.subr.mxu0 0.0
    %350 = vmatpush1.msra.mxu0 0.0
    %351 = vmatprep.subr.mxu0 0.0
    %352 = vmatpush1.msra.mxu0 0.0
    %353 = vmatprep.subr.mxu0 0.0
    %354 = vmatpush1.msra.mxu0 0.0
    %355 = vmatprep.subr.mxu0 0.0
    %356 = vmatpush1.msra.mxu0 0.0
    %357 = vmatprep.subr.mxu0 0.0
    %358 = vmatpush1.msra.mxu0 0.0
    %359 = vmatprep.mubr.f32.mxu0 0.0
    %360 = vmatmul.mubr.f32.gmra.mrb[0].mxu0 %v289
    %v361 = vpop.f32.mrb[0].mxu0
    %v362 = vadd.f32 0.0, %v361
    %v363 = vpop.f32.mrb[0].mxu0
    %364 = vmatprep.mubr.f32.mxu0 0.0
    %365 = vmatmul.mubr.f32.gmra.mrb[0].mxu0 %v291
    %v366 = vpop.f32.mrb[0].mxu0
    %v367 = vadd.f32 0.0, %v366
    %v368 = vpop.f32.mrb[0].mxu0
    %369 = vdwg.mxu0
    %372 = vrot.lane.b32.xlu0 %v170, 91
    %v373 = vpop.permute.xlu0 %372
    %374 = vrot.lane.b32.xlu0 %v172, 91
    %v375 = vpop.permute.xlu0 %374
    %381 = vrot.lane.b32.xlu0 %v173, 29
    %v382 = vpop.permute.xlu0 %381
    %383 = vrot.lane.b32.xlu0 %v174, 29
    %v384 = vpop.permute.xlu0 %383
    %385 = vrot.lane.b32.xlu0 %v175, 29
    %v386 = vpop.permute.xlu0 %385
    %387 = vrot.lane.b32.xlu0 %v176, 29
    %v388 = vpop.permute.xlu0 %387
    %389 = vrot.lane.b32.xlu0 %v177, 29
    %v390 = vpop.permute.xlu0 %389
    %391 = vrot.lane.b32.xlu0 %v178, 29
    %v392 = vpop.permute.xlu0 %391
    %393 = vrot.lane.b32.xlu0 %v179, 29
    %v394 = vpop.permute.xlu0 %393
    %395 = vrot.lane.b32.xlu0 %v180, 29
    %v396 = vpop.permute.xlu0 %395
    %397 = vrot.lane.b32.xlu0 %v181, 29
    %v398 = vpop.permute.xlu0 %397
    %399 = vrot.lane.b32.xlu0 %v182, 29
    %v400 = vpop.permute.xlu0 %399
    %vm401 = vcmask 236544
    %v402 = vsel %vm401, %v382, %v384
    %v403 = vsel %vm401, %v386, %v388
    %v404 = vsel %vm401, %v390, %v392
    %v405 = vsel %vm401, %v394, %v396
    %v406 = vsel %vm401, %v398, %v400
    %v415 = vsel %vm70, %v373, 0
    %v417 = vsel %vm70, %v375, 0
    %v419 = vsel %vm77, %v406, 0
    %v421 = vsel %vm77, %v400, 0
    %423 = vmatprep.subr.mxu0 %v384
    %424 = vmatpush1.msra.mxu0 %v402
    %425 = vmatprep.subr.mxu0 %v388
    %426 = vmatpush1.msra.mxu0 %v403
    %427 = vmatprep.subr.mxu0 %v392
    %428 = vmatpush1.msra.mxu0 %v404
    %429 = vmatprep.subr.mxu0 %v396
    %430 = vmatpush1.msra.mxu0 %v405
    %431 = vmatprep.subr.mxu0 %v421
    %432 = vmatpush1.msra.mxu0 %v419
    %433 = vmatprep.subr.mxu0 0.0
    %434 = vmatpush1.msra.mxu0 0.0
    %435 = vmatprep.subr.mxu0 0.0
    %436 = vmatpush1.msra.mxu0 0.0
    %437 = vmatprep.subr.mxu0 0.0
    %438 = vmatpush1.msra.mxu0 0.0
    %439 = vmatprep.subr.mxu0 0.0
    %440 = vmatpush1.msra.mxu0 0.0
    %441 = vmatprep.subr.mxu0 0.0
    %442 = vmatpush1.msra.mxu0 0.0
    %443 = vmatprep.subr.mxu0 0.0
    %444 = vmatpush1.msra.mxu0 0.0
    %445 = vmatprep.subr.mxu0 0.0
    %446 = vmatpush1.msra.mxu0 0.0
    %447 = vmatprep.subr.mxu0 0.0
    %448 = vmatpush1.msra.mxu0 0.0
    %449 = vmatprep.subr.mxu0 0.0
    %450 = vmatpush1.msra.mxu0 0.0
    %451 = vmatprep.subr.mxu0 0.0
    %452 = vmatpush1.msra.mxu0 0.0
    %453 = vmatprep.subr.mxu0 0.0
    %454 = vmatpush1.msra.mxu0 0.0
    %455 = vmatprep.subr.mxu0 0.0
    %456 = vmatpush1.msra.mxu0 0.0
    %457 = vmatprep.subr.mxu0 0.0
    %458 = vmatpush1.msra.mxu0 0.0
    %459 = vmatprep.subr.mxu0 0.0
    %460 = vmatpush1.msra.mxu0 0.0
    %461 = vmatprep.subr.mxu0 0.0
    %462 = vmatpush1.msra.mxu0 0.0
    %463 = vmatprep.subr.mxu0 0.0
    %464 = vmatpush1.msra.mxu0 0.0
    %465 = vmatprep.subr.mxu0 0.0
    %466 = vmatpush1.msra.mxu0 0.0
    %467 = vmatprep.subr.mxu0 0.0
    %468 = vmatpush1.msra.mxu0 0.0
    %469 = vmatprep.subr.mxu0 0.0
    %470 = vmatpush1.msra.mxu0 0.0
    %471 = vmatprep.subr.mxu0 0.0
    %472 = vmatpush1.msra.mxu0 0.0
    %473 = vmatprep.subr.mxu0 0.0
    %474 = vmatpush1.msra.mxu0 0.0
    %475 = vmatprep.subr.mxu0 0.0
    %476 = vmatpush1.msra.mxu0 0.0
    %477 = vmatprep.subr.mxu0 0.0
    %478 = vmatpush1.msra.mxu0 0.0
    %479 = vmatprep.subr.mxu0 0.0
    %480 = vmatpush1.msra.mxu0 0.0
    %481 = vmatprep.subr.mxu0 0.0
    %482 = vmatpush1.msra.mxu0 0.0
    %483 = vmatprep.subr.mxu0 0.0
    %484 = vmatpush1.msra.mxu0 0.0
    %485 = vmatprep.subr.mxu0 0.0
    %486 = vmatpush1.msra.mxu0 0.0
    %487 = vmatprep.mubr.f32.mxu0 0.0
    %488 = vmatmul.mubr.f32.gmra.mrb[0].mxu0 %v415
    %v489 = vpop.f32.mrb[0].mxu0
    %v490 = vadd.f32 0.0, %v489
    %v491 = vpop.f32.mrb[0].mxu0
    %v492 = vadd.f32 0.0, %v491
    %493 = vmatprep.mubr.f32.mxu0 0.0
    %494 = vmatmul.mubr.f32.gmra.mrb[0].mxu0 %v417
    %v495 = vpop.f32.mrb[0].mxu0
    %v496 = vadd.f32 0.0, %v495
    %v497 = vpop.f32.mrb[0].mxu0
    %v498 = vadd.f32 0.0, %v497
    %499 = vdwg.mxu0
    %500 = vrot.lane.b32.xlu0 %v169, 95
    %v501 = vpop.permute.xlu0 %500
    %502 = vrot.lane.b32.xlu0 %v171, 95
    %v503 = vpop.permute.xlu0 %502
    %v505 = vsel %vm70, %v259, 0
    %v508 = vsel %vm70, %v264, 0
    %v510 = vsel %vm70, %v501, 0
    %v512 = vsel %vm70, %v503, 0
    %514 = vmatprep.subr.mxu0 0.0
    %515 = vmatpush1.xpose.msra.mxu0 %v510
    %516 = vmatprep.subr.mxu0 0.0
    %517 = vmatpush1.xpose.msra.mxu0 %v512
    %518 = vmatprep.subr.mxu0 0.0
    %519 = vmatpush1.xpose.msra.mxu0 0.0
    %520 = vmatprep.subr.mxu0 0.0
    %521 = vmatpush1.xpose.msra.mxu0 0.0
    %522 = vmatprep.subr.mxu0 0.0
    %523 = vmatpush1.xpose.msra.mxu0 0.0
    %524 = vmatprep.subr.mxu0 0.0
    %525 = vmatpush1.xpose.msra.mxu0 0.0
    %526 = vmatprep.subr.mxu0 0.0
    %527 = vmatpush1.xpose.msra.mxu0 0.0
    %528 = vmatprep.subr.mxu0 0.0
    %529 = vmatpush1.xpose.msra.mxu0 0.0
    %530 = vmatprep.subr.mxu0 0.0
    %531 = vmatpush1.xpose.msra.mxu0 0.0
    %532 = vmatprep.subr.mxu0 0.0
    %533 = vmatpush1.xpose.msra.mxu0 0.0
    %534 = vmatprep.subr.mxu0 0.0
    %535 = vmatpush1.xpose.msra.mxu0 0.0
    %536 = vmatprep.subr.mxu0 0.0
    %537 = vmatpush1.xpose.msra.mxu0 0.0
    %538 = vmatprep.subr.mxu0 0.0
    %539 = vmatpush1.xpose.msra.mxu0 0.0
    %540 = vmatprep.subr.mxu0 0.0
    %541 = vmatpush1.xpose.msra.mxu0 0.0
    %542 = vmatprep.subr.mxu0 0.0
    %543 = vmatpush1.xpose.msra.mxu0 0.0
    %544 = vmatprep.subr.mxu0 0.0
    %545 = vmatpush1.xpose.msra.mxu0 0.0
    %546 = vmatprep.subr.mxu0 0.0
    %547 = vmatpush1.xpose.msra.mxu0 0.0
    %548 = vmatprep.subr.mxu0 0.0
    %549 = vmatpush1.xpose.msra.mxu0 0.0
    %550 = vmatprep.subr.mxu0 0.0
    %551 = vmatpush1.xpose.msra.mxu0 0.0
    %552 = vmatprep.subr.mxu0 0.0
    %553 = vmatpush1.xpose.msra.mxu0 0.0
    %554 = vmatprep.subr.mxu0 0.0
    %555 = vmatpush1.xpose.msra.mxu0 0.0
    %556 = vmatprep.subr.mxu0 0.0
    %557 = vmatpush1.xpose.msra.mxu0 0.0
    %558 = vmatprep.subr.mxu0 0.0
    %559 = vmatpush1.xpose.msra.mxu0 0.0
    %560 = vmatprep.subr.mxu0 0.0
    %561 = vmatpush1.xpose.msra.mxu0 0.0
    %562 = vmatprep.subr.mxu0 0.0
    %563 = vmatpush1.xpose.msra.mxu0 0.0
    %564 = vmatprep.subr.mxu0 0.0
    %565 = vmatpush1.xpose.msra.mxu0 0.0
    %566 = vmatprep.subr.mxu0 0.0
    %567 = vmatpush1.xpose.msra.mxu0 0.0
    %568 = vmatprep.subr.mxu0 0.0
    %569 = vmatpush1.xpose.msra.mxu0 0.0
    %570 = vmatprep.subr.mxu0 0.0
    %571 = vmatpush1.xpose.msra.mxu0 0.0
    %572 = vmatprep.subr.mxu0 0.0
    %573 = vmatpush1.xpose.msra.mxu0 0.0
    %574 = vmatprep.subr.mxu0 0.0
    %575 = vmatpush1.xpose.msra.mxu0 0.0
    %576 = vmatprep.subr.mxu0 0.0
    %577 = vmatpush1.xpose.msra.mxu0 0.0
    %578 = vmatprep.mubr.f32.mxu0 0.0
    %579 = vmatmul.mubr.f32.gmra.mrb[0].mxu0 %v505
    %v580 = vpop.f32.mrb[0].mxu0
    %v581 = vadd.f32 0.0, %v580
    %v582 = vpop.f32.mrb[0].mxu0
    %583 = vmatprep.mubr.f32.mxu0 0.0
    %584 = vmatmul.mubr.f32.gmra.mrb[0].mxu0 %v508
    %v585 = vpop.f32.mrb[0].mxu0
    %v586 = vadd.f32 0.0, %v585
    %v587 = vpop.f32.mrb[0].mxu0
    %588 = vdwg.mxu0
    %589 = vrot.lane.b32.xlu0 %v169, 29
    %v590 = vpop.permute.xlu0 %589
    %591 = vrot.lane.b32.xlu0 %v170, 29
    %v592 = vpop.permute.xlu0 %591
    %593 = vrot.lane.b32.xlu0 %v171, 29
    %v594 = vpop.permute.xlu0 %593
    %595 = vrot.lane.b32.xlu0 %v172, 29
    %v596 = vpop.permute.xlu0 %595
    %v597 = vsel %vm401, %v590, %v592
    %v598 = vsel %vm401, %v594, %v596
    %v600 = vsel %vm70, %v362, 0
    %v603 = vsel %vm70, %v367, 0
    %v605 = vsel %vm70, %v597, 0
    %v607 = vsel %vm70, %v598, 0
    %609 = vmatprep.subr.mxu0 0.0
    %610 = vmatpush1.xpose.msra.mxu0 %v605
    %611 = vmatprep.subr.mxu0 0.0
    %612 = vmatpush1.xpose.msra.mxu0 %v607
    %613 = vmatprep.subr.mxu0 0.0
    %614 = vmatpush1.xpose.msra.mxu0 0.0
    %615 = vmatprep.subr.mxu0 0.0
    %616 = vmatpush1.xpose.msra.mxu0 0.0
    %617 = vmatprep.subr.mxu0 0.0
    %618 = vmatpush1.xpose.msra.mxu0 0.0
    %619 = vmatprep.subr.mxu0 0.0
    %620 = vmatpush1.xpose.msra.mxu0 0.0
    %621 = vmatprep.subr.mxu0 0.0
    %622 = vmatpush1.xpose.msra.mxu0 0.0
    %623 = vmatprep.subr.mxu0 0.0
    %624 = vmatpush1.xpose.msra.mxu0 0.0
    %625 = vmatprep.subr.mxu0 0.0
    %626 = vmatpush1.xpose.msra.mxu0 0.0
    %627 = vmatprep.subr.mxu0 0.0
    %628 = vmatpush1.xpose.msra.mxu0 0.0
    %629 = vmatprep.subr.mxu0 0.0
    %630 = vmatpush1.xpose.msra.mxu0 0.0
    %631 = vmatprep.subr.mxu0 0.0
    %632 = vmatpush1.xpose.msra.mxu0 0.0
    %633 = vmatprep.subr.mxu0 0.0
    %634 = vmatpush1.xpose.msra.mxu0 0.0
    %635 = vmatprep.subr.mxu0 0.0
    %636 = vmatpush1.xpose.msra.mxu0 0.0
    %637 = vmatprep.subr.mxu0 0.0
    %638 = vmatpush1.xpose.msra.mxu0 0.0
    %639 = vmatprep.subr.mxu0 0.0
    %640 = vmatpush1.xpose.msra.mxu0 0.0
    %641 = vmatprep.subr.mxu0 0.0
    %642 = vmatpush1.xpose.msra.mxu0 0.0
    %643 = vmatprep.subr.mxu0 0.0
    %644 = vmatpush1.xpose.msra.mxu0 0.0
    %645 = vmatprep.subr.mxu0 0.0
    %646 = vmatpush1.xpose.msra.mxu0 0.0
    %647 = vmatprep.subr.mxu0 0.0
    %648 = vmatpush1.xpose.msra.mxu0 0.0
    %649 = vmatprep.subr.mxu0 0.0
    %650 = vmatpush1.xpose.msra.mxu0 0.0
    %651 = vmatprep.subr.mxu0 0.0
    %652 = vmatpush1.xpose.msra.mxu0 0.0
    %653 = vmatprep.subr.mxu0 0.0
    %654 = vmatpush1.xpose.msra.mxu0 0.0
    %655 = vmatprep.subr.mxu0 0.0
    %656 = vmatpush1.xpose.msra.mxu0 0.0
    %657 = vmatprep.subr.mxu0 0.0
    %658 = vmatpush1.xpose.msra.mxu0 0.0
    %659 = vmatprep.subr.mxu0 0.0
    %660 = vmatpush1.xpose.msra.mxu0 0.0
    %661 = vmatprep.subr.mxu0 0.0
    %662 = vmatpush1.xpose.msra.mxu0 0.0
    %663 = vmatprep.subr.mxu0 0.0
    %664 = vmatpush1.xpose.msra.mxu0 0.0
    %665 = vmatprep.subr.mxu0 0.0
    %666 = vmatpush1.xpose.msra.mxu0 0.0
    %667 = vmatprep.subr.mxu0 0.0
    %668 = vmatpush1.xpose.msra.mxu0 0.0
    %669 = vmatprep.subr.mxu0 0.0
    %670 = vmatpush1.xpose.msra.mxu0 0.0
    %671 = vmatprep.subr.mxu0 0.0
    %672 = vmatpush1.xpose.msra.mxu0 0.0
    %673 = vmatprep.mubr.f32.mxu0 0.0
    %674 = vmatmul.mubr.f32.gmra.mrb[0].mxu0 %v600
    %v675 = vpop.f32.mrb[0].mxu0
    %v676 = vadd.f32 0.0, %v675
    %v677 = vpop.f32.mrb[0].mxu0
    %678 = vmatprep.mubr.f32.mxu0 0.0
    %679 = vmatmul.mubr.f32.gmra.mrb[0].mxu0 %v603
    %v680 = vpop.f32.mrb[0].mxu0
    %v681 = vadd.f32 0.0, %v680
    %v682 = vpop.f32.mrb[0].mxu0
    %683 = vdwg.mxu0
    %684 = vrot.lane.b32.xlu0 %v362, 95
    %v685 = vpop.permute.xlu0 %684
    %686 = vrot.lane.b32.xlu0 %v367, 95
    %v687 = vpop.permute.xlu0 %686
    %688 = vrot.lane.b32.xlu0 %v170, 124
    %v689 = vpop.permute.xlu0 %688
    %690 = vrot.lane.b32.xlu0 %v172, 124
    %v691 = vpop.permute.xlu0 %690
    %v692 = vsel %vm70, %v685, 0
    %v694 = vsel %vm70, %v687, 0
    %v696 = vsel %vm70, %v689, 0
    %v698 = vsel %vm70, %v691, 0
    %700 = vmatprep.subr.mxu0 0.0
    %701 = vmatpush1.xpose.msra.mxu0 %v696
    %702 = vmatprep.subr.mxu0 0.0
    %703 = vmatpush1.xpose.msra.mxu0 %v698
    %704 = vmatprep.subr.mxu0 0.0
    %705 = vmatpush1.xpose.msra.mxu0 0.0
    %706 = vmatprep.subr.mxu0 0.0
    %707 = vmatpush1.xpose.msra.mxu0 0.0
    %708 = vmatprep.subr.mxu0 0.0
    %709 = vmatpush1.xpose.msra.mxu0 0.0
    %710 = vmatprep.subr.mxu0 0.0
    %711 = vmatpush1.xpose.msra.mxu0 0.0
    %712 = vmatprep.subr.mxu0 0.0
    %713 = vmatpush1.xpose.msra.mxu0 0.0
    %714 = vmatprep.subr.mxu0 0.0
    %715 = vmatpush1.xpose.msra.mxu0 0.0
    %716 = vmatprep.subr.mxu0 0.0
    %717 = vmatpush1.xpose.msra.mxu0 0.0
    %718 = vmatprep.subr.mxu0 0.0
    %719 = vmatpush1.xpose.msra.mxu0 0.0
    %720 = vmatprep.subr.mxu0 0.0
    %721 = vmatpush1.xpose.msra.mxu0 0.0
    %722 = vmatprep.subr.mxu0 0.0
    %723 = vmatpush1.xpose.msra.mxu0 0.0
    %724 = vmatprep.subr.mxu0 0.0
    %725 = vmatpush1.xpose.msra.mxu0 0.0
    %726 = vmatprep.subr.mxu0 0.0
    %727 = vmatpush1.xpose.msra.mxu0 0.0
    %728 = vmatprep.subr.mxu0 0.0
    %729 = vmatpush1.xpose.msra.mxu0 0.0
    %730 = vmatprep.subr.mxu0 0.0
    %731 = vmatpush1.xpose.msra.mxu0 0.0
    %732 = vmatprep.subr.mxu0 0.0
    %733 = vmatpush1.xpose.msra.mxu0 0.0
    %734 = vmatprep.subr.mxu0 0.0
    %735 = vmatpush1.xpose.msra.mxu0 0.0
    %736 = vmatprep.subr.mxu0 0.0
    %737 = vmatpush1.xpose.msra.mxu0 0.0
    %738 = vmatprep.subr.mxu0 0.0
    %739 = vmatpush1.xpose.msra.mxu0 0.0
    %740 = vmatprep.subr.mxu0 0.0
    %741 = vmatpush1.xpose.msra.mxu0 0.0
    %742 = vmatprep.subr.mxu0 0.0
    %743 = vmatpush1.xpose.msra.mxu0 0.0
    %744 = vmatprep.subr.mxu0 0.0
    %745 = vmatpush1.xpose.msra.mxu0 0.0
    %746 = vmatprep.subr.mxu0 0.0
    %747 = vmatpush1.xpose.msra.mxu0 0.0
    %748 = vmatprep.subr.mxu0 0.0
    %749 = vmatpush1.xpose.msra.mxu0 0.0
    %750 = vmatprep.subr.mxu0 0.0
    %751 = vmatpush1.xpose.msra.mxu0 0.0
    %752 = vmatprep.subr.mxu0 0.0
    %753 = vmatpush1.xpose.msra.mxu0 0.0
    %754 = vmatprep.subr.mxu0 0.0
    %755 = vmatpush1.xpose.msra.mxu0 0.0
    %756 = vmatprep.subr.mxu0 0.0
    %757 = vmatpush1.xpose.msra.mxu0 0.0
    %758 = vmatprep.subr.mxu0 0.0
    %759 = vmatpush1.xpose.msra.mxu0 0.0
    %760 = vmatprep.subr.mxu0 0.0
    %761 = vmatpush1.xpose.msra.mxu0 0.0
    %762 = vmatprep.subr.mxu0 0.0
    %763 = vmatpush1.xpose.msra.mxu0 0.0
    %764 = vmatprep.mubr.f32.mxu0 0.0
    %765 = vmatmul.mubr.f32.gmra.mrb[0].mxu0 %v692
    %v766 = vpop.f32.mrb[0].mxu0
    %v767 = vadd.f32 0.0, %v766
    %v768 = vpop.f32.mrb[0].mxu0
    %769 = vmatprep.mubr.f32.mxu0 0.0
    %770 = vmatmul.mubr.f32.gmra.mrb[0].mxu0 %v694
    %v771 = vpop.f32.mrb[0].mxu0
    %v772 = vadd.f32 0.0, %v771
    %v773 = vpop.f32.mrb[0].mxu0
    %774 = vdwg.mxu0
    %777 = vrot.lane.b32.xlu0 %v490, 95
    %v778 = vpop.permute.xlu0 %777
    %779 = vrot.lane.b32.xlu0 %v496, 95
    %v780 = vpop.permute.xlu0 %779
    %781 = vrot.lane.b32.xlu0 %v490, 62
    %v782 = vpop.permute.xlu0 %781
    %783 = vrot.lane.b32.xlu0 %v496, 62
    %v784 = vpop.permute.xlu0 %783
    %787 = vrot.lane.b32.xlu0 %v490, 29
    %v788 = vpop.permute.xlu0 %787
    %789 = vrot.lane.b32.xlu0 %v492, 29
    %v790 = vpop.permute.xlu0 %789
    %791 = vrot.lane.b32.xlu0 %v496, 29
    %v792 = vpop.permute.xlu0 %791
    %793 = vrot.lane.b32.xlu0 %v498, 29
    %v794 = vpop.permute.xlu0 %793
    %v795 = vsel %vm401, %v788, %v790
    %v796 = vsel %vm401, %v792, %v794
    %797 = vrot.lane.b32.xlu0 %v170, 58
    %v798 = vpop.permute.xlu0 %797
    %799 = vrot.lane.b32.xlu0 %v172, 58
    %v800 = vpop.permute.xlu0 %799
    %v801 = vsel %vm70, %v490, 0
    %v803 = vsel %vm70, %v496, 0
    %v805 = vsel %vm70, %v778, 0
    %v807 = vsel %vm70, %v780, 0
    %v809 = vsel %vm70, %v782, 0
    %v811 = vsel %vm70, %v784, 0
    %v813 = vsel %vm70, %v795, 0
    %v815 = vsel %vm70, %v796, 0
    %v817 = vsel %vm70, %v798, 0
    %v819 = vsel %vm70, %v800, 0
    %821 = vmatprep.subr.mxu0 0.0
    %822 = vmatpush1.xpose.msra.mxu0 %v817
    %823 = vmatprep.subr.mxu0 0.0
    %824 = vmatpush1.xpose.msra.mxu0 %v819
    %825 = vmatprep.subr.mxu0 0.0
    %826 = vmatpush1.xpose.msra.mxu0 0.0
    %827 = vmatprep.subr.mxu0 0.0
    %828 = vmatpush1.xpose.msra.mxu0 0.0
    %829 = vmatprep.subr.mxu0 0.0
    %830 = vmatpush1.xpose.msra.mxu0 0.0
    %831 = vmatprep.subr.mxu0 0.0
    %832 = vmatpush1.xpose.msra.mxu0 0.0
    %833 = vmatprep.subr.mxu0 0.0
    %834 = vmatpush1.xpose.msra.mxu0 0.0
    %835 = vmatprep.subr.mxu0 0.0
    %836 = vmatpush1.xpose.msra.mxu0 0.0
    %837 = vmatprep.subr.mxu0 0.0
    %838 = vmatpush1.xpose.msra.mxu0 0.0
    %839 = vmatprep.subr.mxu0 0.0
    %840 = vmatpush1.xpose.msra.mxu0 0.0
    %841 = vmatprep.subr.mxu0 0.0
    %842 = vmatpush1.xpose.msra.mxu0 0.0
    %843 = vmatprep.subr.mxu0 0.0
    %844 = vmatpush1.xpose.msra.mxu0 0.0
    %845 = vmatprep.subr.mxu0 0.0
    %846 = vmatpush1.xpose.msra.mxu0 0.0
    %847 = vmatprep.subr.mxu0 0.0
    %848 = vmatpush1.xpose.msra.mxu0 0.0
    %849 = vmatprep.subr.mxu0 0.0
    %850 = vmatpush1.xpose.msra.mxu0 0.0
    %851 = vmatprep.subr.mxu0 0.0
    %852 = vmatpush1.xpose.msra.mxu0 0.0
    %853 = vmatprep.subr.mxu0 0.0
    %854 = vmatpush1.xpose.msra.mxu0 0.0
    %855 = vmatprep.subr.mxu0 0.0
    %856 = vmatpush1.xpose.msra.mxu0 0.0
    %857 = vmatprep.subr.mxu0 0.0
    %858 = vmatpush1.xpose.msra.mxu0 0.0
    %859 = vmatprep.subr.mxu0 0.0
    %860 = vmatpush1.xpose.msra.mxu0 0.0
    %861 = vmatprep.subr.mxu0 0.0
    %862 = vmatpush1.xpose.msra.mxu0 0.0
    %863 = vmatprep.subr.mxu0 0.0
    %864 = vmatpush1.xpose.msra.mxu0 0.0
    %865 = vmatprep.subr.mxu0 0.0
    %866 = vmatpush1.xpose.msra.mxu0 0.0
    %867 = vmatprep.subr.mxu0 0.0
    %868 = vmatpush1.xpose.msra.mxu0 0.0
    %869 = vmatprep.subr.mxu0 0.0
    %870 = vmatpush1.xpose.msra.mxu0 0.0
    %871 = vmatprep.subr.mxu0 0.0
    %872 = vmatpush1.xpose.msra.mxu0 0.0
    %873 = vmatprep.subr.mxu0 0.0
    %874 = vmatpush1.xpose.msra.mxu0 0.0
    %875 = vmatprep.subr.mxu0 0.0
    %876 = vmatpush1.xpose.msra.mxu0 0.0
    %877 = vmatprep.subr.mxu0 0.0
    %878 = vmatpush1.xpose.msra.mxu0 0.0
    %879 = vmatprep.subr.mxu0 0.0
    %880 = vmatpush1.xpose.msra.mxu0 0.0
    %881 = vmatprep.subr.mxu0 0.0
    %882 = vmatpush1.xpose.msra.mxu0 0.0
    %883 = vmatprep.subr.mxu0 0.0
    %884 = vmatpush1.xpose.msra.mxu0 0.0
    %885 = vmatprep.mubr.f32.mxu0 0.0
    %886 = vmatmul.mubr.f32.gmra.mrb[0].mxu0 %v801
    %v887 = vpop.f32.mrb[0].mxu0
    %v888 = vadd.f32 0.0, %v887
    %v889 = vpop.f32.mrb[0].mxu0
    %890 = vmatprep.mubr.f32.mxu0 0.0
    %891 = vmatmul.mubr.f32.gmra.mrb[0].mxu0 %v803
    %v892 = vpop.f32.mrb[0].mxu0
    %v893 = vadd.f32 0.0, %v892
    %v894 = vpop.f32.mrb[0].mxu0
    %895 = vmatprep.mubr.f32.mxu0 0.0
    %896 = vmatmul.mubr.f32.gmra.mrb[0].mxu0 %v805
    %v897 = vpop.f32.mrb[0].mxu0
    %v898 = vadd.f32 0.0, %v897
    %v899 = vpop.f32.mrb[0].mxu0
    %900 = vmatprep.mubr.f32.mxu0 0.0
    %901 = vmatmul.mubr.f32.gmra.mrb[0].mxu0 %v807
    %v902 = vpop.f32.mrb[0].mxu0
    %v903 = vadd.f32 0.0, %v902
    %v904 = vpop.f32.mrb[0].mxu0
    %905 = vmatprep.mubr.f32.mxu0 0.0
    %906 = vmatmul.mubr.f32.gmra.mrb[0].mxu0 %v809
    %v907 = vpop.f32.mrb[0].mxu0
    %v908 = vadd.f32 0.0, %v907
    %v909 = vpop.f32.mrb[0].mxu0
    %910 = vmatprep.mubr.f32.mxu0 0.0
    %911 = vmatmul.mubr.f32.gmra.mrb[0].mxu0 %v811
    %v912 = vpop.f32.mrb[0].mxu0
    %v913 = vadd.f32 0.0, %v912
    %v914 = vpop.f32.mrb[0].mxu0
    %915 = vmatprep.mubr.f32.mxu0 0.0
    %916 = vmatmul.mubr.f32.gmra.mrb[0].mxu0 %v813
    %v917 = vpop.f32.mrb[0].mxu0
    %v918 = vadd.f32 0.0, %v917
    %v919 = vpop.f32.mrb[0].mxu0
    %920 = vmatprep.mubr.f32.mxu0 0.0
    %921 = vmatmul.mubr.f32.gmra.mrb[0].mxu0 %v815
    %v922 = vpop.f32.mrb[0].mxu0
    %v923 = vadd.f32 0.0, %v922
    %v924 = vpop.f32.mrb[0].mxu0
    %925 = vdwg.mxu0
    %v926 = vlaneseq
    %v927 = vshrl.u32 %v926, 7
    %v928 = vadd.s32 %v927, 8
    %v929 = vlaneseq
    %v930 = vand.u32 %v929, 127
    %vm931 = vcmp.ge.s32.totalorder %v930, %v927
    %vm932 = vcmp.ge.s32.totalorder %v930, %v928
    %v933 = vsel %vm931, %v581, 0.0
    %v934 = vsel %vm932, %v586, 0.0
    %vm935 = vcmp.gt.s32.totalorder %v930, %v927
    %vm936 = vcmp.gt.s32.totalorder %v930, %v928
    %v937 = vsel %vm935, %v581, 0.0
    %v938 = vsel %vm936, %v586, 0.0
    %939 = vxpose.xlu0.b32.start [1/16] %v937, 128
    %940 = vxpose.xlu0.b32.cont [2/16] %v938, 128
    %941 = vxpose.xlu0.b32.cont [3/16] 0.0, 128
    %942 = vxpose.xlu0.b32.cont [4/16] 0.0, 128
    %943 = vxpose.xlu0.b32.cont [5/16] 0.0, 128
    %944 = vxpose.xlu0.b32.cont [6/16] 0.0, 128
    %945 = vxpose.xlu0.b32.cont [7/16] 0.0, 128
    %946 = vxpose.xlu0.b32.cont [8/16] 0.0, 128
    %947 = vxpose.xlu0.b32.cont [9/16] 0.0, 128
    %948 = vxpose.xlu0.b32.cont [10/16] 0.0, 128
    %949 = vxpose.xlu0.b32.cont [11/16] 0.0, 128
    %950 = vxpose.xlu0.b32.cont [12/16] 0.0, 128
    %951 = vxpose.xlu0.b32.cont [13/16] 0.0, 128
    %952 = vxpose.xlu0.b32.cont [14/16] 0.0, 128
    %953 = vxpose.xlu0.b32.cont [15/16] 0.0, 128
    %954 = vxpose.xlu0.b32.end [16/16] 0.0, 128
    %v955 = vpop.trf.xlu0
    %v956 = vpop.trf.xlu0
    %v957 = vpop.trf.xlu0
    %v958 = vpop.trf.xlu0
    %v959 = vpop.trf.xlu0
    %v960 = vpop.trf.xlu0
    %v961 = vpop.trf.xlu0
    %v962 = vpop.trf.xlu0
    %v963 = vpop.trf.xlu0
    %v964 = vpop.trf.xlu0
    %v965 = vpop.trf.xlu0
    %v966 = vpop.trf.xlu0
    %v967 = vpop.trf.xlu0
    %v968 = vpop.trf.xlu0
    %v969 = vpop.trf.xlu0
    %v970 = vpop.trf.xlu0
    %v971 = vadd.f32 %v933, %v955
    %v972 = vadd.f32 %v934, %v956
    %975 = vrot.lane.b32.xlu0 %v676, 16
    %v976 = vpop.permute.xlu0 %975
    %977 = vrot.lane.b32.xlu0 %v681, 16
    %v978 = vpop.permute.xlu0 %977
    %983 = vrot.lane.b32.xlu0 %v767, 32
    %v984 = vpop.permute.xlu0 %983
    %985 = vrot.lane.b32.xlu0 %v772, 32
    %v986 = vpop.permute.xlu0 %985
    %991 = vrot.lane.b32.xlu0 %v888, 48
    %v992 = vpop.permute.xlu0 %991
    %993 = vrot.lane.b32.xlu0 %v893, 48
    %v994 = vpop.permute.xlu0 %993
    %999 = vrot.lane.b32.xlu0 %v898, 64
    %v1000 = vpop.permute.xlu0 %999
    %1001 = vrot.lane.b32.xlu0 %v903, 64
    %v1002 = vpop.permute.xlu0 %1001
    %1007 = vrot.lane.b32.xlu0 %v908, 80
    %v1008 = vpop.permute.xlu0 %1007
    %1009 = vrot.lane.b32.xlu0 %v913, 80
    %v1010 = vpop.permute.xlu0 %1009
    %1015 = vrot.lane.b32.xlu0 %v918, 96
    %v1016 = vpop.permute.xlu0 %1015
    %1017 = vrot.lane.b32.xlu0 %v923, 96
    %v1018 = vpop.permute.xlu0 %1017
    %vm1021 = vcmask 130048
    %v1022 = vsel %vm1021, %v971, %v976
    %v1023 = vsel %vm1021, %v972, %v978
    %v1024 = vsel %vm57, %v1022, %v984
    %v1025 = vsel %vm57, %v1023, %v986
    %vm1026 = vcmask 392192
    %v1027 = vsel %vm1026, %v1024, %v992
    %v1028 = vsel %vm1026, %v1025, %v994
    %vm1029 = vcmask 523264
    %v1030 = vsel %vm1029, %v1027, %v1000
    %v1031 = vsel %vm1029, %v1028, %v1002
    %vm1032 = vcmask 654336
    %v1033 = vsel %vm1032, %v1030, %v1008
    %v1034 = vsel %vm1032, %v1031, %v1010
    %vm1035 = vcmask 785408
    %v1036 = vsel %vm1035, %v1033, %v1016
    %v1037 = vsel %vm1035, %v1034, %v1018
    %vm1038 = vcmask 916480
    %v1039 = vsel %vm1038, %v1036, 0.0
    %v1040 = vsel %vm1038, %v1037, 0.0
    %1041 = vst [vmem:[%s3] sm:$0xff] %v1039
    %1042 = vst [vmem:[%s3 + $0x8] sm:$0xff] %v1040
    // Predicated region
    $region26: #{srl_first_order_scorer.1} parent=1 // pred_check
      _
    $region27: #{srl_first_order_scorer.1} parent=1 // pred_check_branch
      %1044 = sbr.rel (0) target = $region29
    $region28: #{srl_first_order_scorer.1} parent=1 // pred_region
      _
    $region29: #{srl_first_order_scorer.1} parent=1 // pred_fallthru
      _
    // Predicated region
    $region30: #{srl_first_order_scorer.1} parent=1 // pred_check
      _
    $region31: #{srl_first_order_scorer.1} parent=1 // pred_check_branch
      %1046 = sbr.rel (0) target = $region33
    $region32: #{srl_first_order_scorer.1} parent=1 // pred_region
      _
    $region33: #{srl_first_order_scorer.1} parent=1 // pred_fallthru
      _
    %1047 = vsyncpa [#allocation3], 1
    %1048 = vsyncpa [#allocation5], 1

</llo_original>
